<compile_context>
chip_gen: v5e
topology: v5e:2x2
jax: 0.10.0
libtpu: 0.0.40
codegen_flags: <defaults>
</compile_context>

<pallas_src>
import jax
import jax.numpy as jnp
from jax.experimental import pallas as pl
from jax.experimental.pallas import tpu as pltpu


def deeponet_kernel(
    # inputs (tiled over batch)
    bx_ref, tx_ref,
    # packed parameters (full blocks, constant across grid steps)
    bw1_ref,    # [Din, H]   bf16
    bwh_ref,    # [3, H, H]  bf16   branch hidden weights, layers 2..4
    twh_ref,    # [3, H, H]  bf16   trunk  hidden weights, layers 2..4
    ow_ref,     # [H, Dout]  bf16
    first_ref,  # [3, H]     f32    rows: bb1, tw1, tb1
    bbh_ref,    # [3, H]     f32    branch biases, layers 2..4
    tbh_ref,    # [3, H]     f32    trunk  biases, layers 2..4
    ob_ref,     # [1, Dout]  f32
    # output (tiled over batch)
    y_ref,
):
    f32 = jnp.float32
    bf16 = jnp.bfloat16

    def mm(x, w):
        # bf16 MXU matmul with f32 accumulation.
        return jnp.dot(x.astype(bf16), w, preferred_element_type=f32)

    bb1 = first_ref[0:1, :]          # [1, H]
    tw1 = first_ref[1:2, :]          # [1, H]
    tb1 = first_ref[2:3, :]          # [1, H]

    # --- first layers ---
    # branch: Linear(Din -> H) + ReLU   (MXU)
    h = jnp.maximum(mm(bx_ref[...], bw1_ref[...]) + bb1, 0.0)   # [TB, H] f32
    # trunk: in_dim == 1 -> broadcasted multiply on the VPU (all f32)
    g = jnp.maximum(tx_ref[...] * tw1 + tb1, 0.0)               # [TB, H] f32

    # --- hidden layers 2..4: separate HxH matmuls (no zero-padded block-diag) ---
    for l in range(3):
        h = mm(h, bwh_ref[l]) + bbh_ref[l:l + 1, :]             # [TB, H]
        g = mm(g, twh_ref[l]) + tbh_ref[l:l + 1, :]             # [TB, H]
        if l < 2:                                               # last layer: no ReLU
            h = jnp.maximum(h, 0.0)
            g = jnp.maximum(g, 0.0)

    # --- combine + output layer ---
    combined = h * g                                            # [TB, H] f32
    y_ref[...] = (mm(combined, ow_ref[...]) + ob_ref[...]).astype(y_ref.dtype)


def _is_megacore():
    """True on chips where one Pallas kernel spans 2 TensorCores (v7x, v4/v5p)."""
    try:
        kind = jax.devices()[0].device_kind.lower()
    except Exception:
        return False
    return ("v7" in kind) or ("v4" in kind) or ("v5p" in kind)


def _choose_tile_b(B):
    """Generation-aware batch tile.

    v5e/v6e (single TensorCore): one grid step, tile_b = B - the grid is a
    serial loop, so extra steps are pure per-step overhead.
    v7x (megacore): 2 large steps (one per TensorCore) once B >= 256.
    Never pick tiny 8..64-row tiles; cap rows/step at 512 for VMEM comfort.
    """
    if _is_megacore() and B >= 256 and B % 16 == 0:
        tile = B // 2
    else:
        tile = B
    if tile > 512:
        for t in (512, 256, 128):
            if B % t == 0:
                return t
    return tile


_PARAM_ORDER = ("bw1", "bwh", "twh", "ow", "first", "bbh", "tbh", "ob")


def _pallas_forward(branch_input, trunk_input, param_vals, tile_b,
                    single_buffer_params):
    B, Din = branch_input.shape
    Dout = param_vals[3].shape[1]        # ow: [H, Dout]
    grid = (B // tile_b,)

    def full_spec(arr):
        nd = arr.ndim
        idx = lambda i, nd=nd: (0,) * nd
        if single_buffer_params:
            # Parameters never change across grid steps -> single buffer.
            return pl.BlockSpec(arr.shape, idx, pipeline_mode=pl.Buffered(1))
        return pl.BlockSpec(arr.shape, idx)

    in_specs = [
        pl.BlockSpec((tile_b, Din), lambda i: (i, 0)),   # branch input tile
        pl.BlockSpec((tile_b, 1), lambda i: (i, 0)),     # trunk input tile
    ] + [full_spec(p) for p in param_vals]

    out_spec = pl.BlockSpec((tile_b, Dout), lambda i: (i, 0))

    return pl.pallas_call(
        deeponet_kernel,
        out_shape=jax.ShapeDtypeStruct((B, Dout), jnp.float32),
        grid_spec=pltpu.PrefetchScalarGridSpec(
            num_scalar_prefetch=0,
            grid=grid,
            in_specs=in_specs,
            out_specs=out_spec,
        ),
        compiler_params=pltpu.CompilerParams(
            dimension_semantics=("parallel",),
        ),
    )(branch_input, trunk_input, *param_vals)


def deeponet_forward(branch_input, trunk_input, packed, *, tile_b=None):
    """packed: dict produced by pack_params()."""
    B, _ = branch_input.shape
    if tile_b is None:
        tile_b = _choose_tile_b(B)
    assert B % tile_b == 0, (B, tile_b)
    param_vals = [packed[k] for k in _PARAM_ORDER]

    if B // tile_b == 1:
        # Single grid step: no cross-step pipelining, buffering mode irrelevant.
        return _pallas_forward(branch_input, trunk_input, param_vals, tile_b, False)
    try:
        return _pallas_forward(branch_input, trunk_input, param_vals, tile_b, True)
    except Exception:
        # pipeline_mode=pl.Buffered(1) not accepted by this JAX/Mosaic build;
        # fall back to default (double-buffered) parameter blocks.
        return _pallas_forward(branch_input, trunk_input, param_vals, tile_b, False)


# MXU-fed weights are stored/rounded to bf16 (tw1 stays f32: it is used on the
# f32 elementwise path for the degenerate trunk first layer).
_MXU_WEIGHTS = {"bw1", "bw2", "bw3", "bw4", "tw2", "tw3", "tw4", "ow"}


def init_params(key, branch_input_dim, trunk_input_dim, hidden_dim, output_dim):
    """Deterministic synthetic init. Returns the 'raw' per-layer parameter dict
    (weights pre-transposed to [in, out], biases [1, out], all f32; MXU weights
    already rounded through bf16 so kernel and reference share values)."""
    shapes = {
        "bw1": (branch_input_dim, hidden_dim), "bb1": (1, hidden_dim),
        "bw2": (hidden_dim, hidden_dim),       "bb2": (1, hidden_dim),
        "bw3": (hidden_dim, hidden_dim),       "bb3": (1, hidden_dim),
        "bw4": (hidden_dim, hidden_dim),       "bb4": (1, hidden_dim),
        "tw1": (trunk_input_dim, hidden_dim),  "tb1": (1, hidden_dim),
        "tw2": (hidden_dim, hidden_dim),       "tb2": (1, hidden_dim),
        "tw3": (hidden_dim, hidden_dim),       "tb3": (1, hidden_dim),
        "tw4": (hidden_dim, hidden_dim),       "tb4": (1, hidden_dim),
        "ow": (hidden_dim, output_dim),        "ob": (1, output_dim),
    }
    raw = {}
    keys = jax.random.split(key, len(shapes))
    for k, (name, shape) in zip(keys, shapes.items()):
        v = (0.05 * jax.random.normal(k, shape)).astype(jnp.float32)
        if name in _MXU_WEIGHTS:
            v = v.astype(jnp.bfloat16).astype(jnp.float32)
        raw[name] = v
    return raw


def pack_params(raw):
    """Pack raw per-layer params into 8 kernel operands (bf16 MXU weights,
    f32 biases / first-layer pack; hidden weights kept separate per review)."""
    f32 = jnp.float32
    bf16 = jnp.bfloat16
    return {
        "bw1": raw["bw1"].astype(bf16),
        "bwh": jnp.stack([raw["bw2"], raw["bw3"], raw["bw4"]]).astype(bf16),
        "twh": jnp.stack([raw["tw2"], raw["tw3"], raw["tw4"]]).astype(bf16),
        "ow": raw["ow"].astype(bf16),
        "first": jnp.concatenate(
            [raw["bb1"], raw["tw1"], raw["tb1"]], axis=0).astype(f32),
        "bbh": jnp.concatenate(
            [raw["bb2"], raw["bb3"], raw["bb4"]], axis=0).astype(f32),
        "tbh": jnp.concatenate(
            [raw["tb2"], raw["tb3"], raw["tb4"]], axis=0).astype(f32),
        "ob": raw["ob"].astype(f32),
    }


def deeponet_reference(branch_input, trunk_input, raw):
    """Pure-JAX f32 reference mirroring the PyTorch forward."""
    h = branch_input
    h = jnp.maximum(h @ raw["bw1"] + raw["bb1"], 0.0)
    h = jnp.maximum(h @ raw["bw2"] + raw["bb2"], 0.0)
    h = jnp.maximum(h @ raw["bw3"] + raw["bb3"], 0.0)
    branch_out = h @ raw["bw4"] + raw["bb4"]

    g = trunk_input
    g = jnp.maximum(g @ raw["tw1"] + raw["tb1"], 0.0)
    g = jnp.maximum(g @ raw["tw2"] + raw["tb2"], 0.0)
    g = jnp.maximum(g @ raw["tw3"] + raw["tb3"], 0.0)
    trunk_out = g @ raw["tw4"] + raw["tb4"]

    combined = branch_out * trunk_out
    return combined @ raw["ow"] + raw["ob"]


if __name__ == "__main__":
    # Small shapes consistent with the module (scaled down from 512/1/256/512).
    B = 16
    BRANCH_IN = 256
    TRUNK_IN = 1
    HIDDEN = 128
    OUT = 128

    key = jax.random.PRNGKey(0)
    k_params, k_bx, k_tx = jax.random.split(key, 3)

    raw = init_params(k_params, BRANCH_IN, TRUNK_IN, HIDDEN, OUT)
    packed = pack_params(raw)

    branch_x = jax.random.normal(k_bx, (B, BRANCH_IN), dtype=jnp.float32)
    trunk_x = jax.random.normal(k_tx, (B, TRUNK_IN), dtype=jnp.float32)

    y = deeponet_forward(branch_x, trunk_x, packed)   # grid=(1,) at this size
    y = jax.block_until_ready(y)

    y_ref = deeponet_reference(branch_x, trunk_x, raw)
    assert y.shape == (B, OUT)
    # bf16 matmul operands with f32 accumulation -> relax tolerance vs f32 reference.
    max_err = float(jnp.max(jnp.abs(y - y_ref)))
    assert jnp.allclose(y, y_ref, atol=3e-2, rtol=3e-2), (
        f"mismatch vs reference (max abs err {max_err})")

    print("KERNEL_OK")
</pallas_src>

<mosaic_0001>
module attributes {stable_mosaic.version = 11 : i64} {
  func.func @deeponet_kernel(%arg0: i32, %arg1: memref<16x256xf32, #tpu.memory_space<vmem>>, %arg2: memref<16x1xf32, #tpu.memory_space<vmem>>, %arg3: memref<256x128xbf16, #tpu.memory_space<vmem>>, %arg4: memref<3x128x128xbf16, #tpu.memory_space<vmem>>, %arg5: memref<3x128x128xbf16, #tpu.memory_space<vmem>>, %arg6: memref<128x128xbf16, #tpu.memory_space<vmem>>, %arg7: memref<3x128xf32, #tpu.memory_space<vmem>>, %arg8: memref<3x128xf32, #tpu.memory_space<vmem>>, %arg9: memref<3x128xf32, #tpu.memory_space<vmem>>, %arg10: memref<1x128xf32, #tpu.memory_space<vmem>>, %arg11: memref<16x128xf32, #tpu.memory_space<vmem>>) attributes {dimension_semantics = [#tpu.dimension_semantics<parallel>], iteration_bounds = array<i64: 1>, scalar_prefetch = 0 : i64, scratch_operands = 0 : i64, tpu.core_type = #tpu.core_type<tc>, window_params = [{transform_indices = @transform_0, window_bounds = array<i64: 16, 256>}, {transform_indices = @transform_1, window_bounds = array<i64: 16, 1>}, {pipeline_mode = #tpu.pipeline_mode<synchronous>, transform_indices = @transform_2, window_bounds = array<i64: 256, 128>}, {pipeline_mode = #tpu.pipeline_mode<synchronous>, transform_indices = @transform_3, window_bounds = array<i64: 3, 128, 128>}, {pipeline_mode = #tpu.pipeline_mode<synchronous>, transform_indices = @transform_4, window_bounds = array<i64: 3, 128, 128>}, {pipeline_mode = #tpu.pipeline_mode<synchronous>, transform_indices = @transform_5, window_bounds = array<i64: 128, 128>}, {pipeline_mode = #tpu.pipeline_mode<synchronous>, transform_indices = @transform_6, window_bounds = array<i64: 3, 128>}, {pipeline_mode = #tpu.pipeline_mode<synchronous>, transform_indices = @transform_7, window_bounds = array<i64: 3, 128>}, {pipeline_mode = #tpu.pipeline_mode<synchronous>, transform_indices = @transform_8, window_bounds = array<i64: 3, 128>}, {pipeline_mode = #tpu.pipeline_mode<synchronous>, transform_indices = @transform_9, window_bounds = array<i64: 1, 128>}, {transform_indices = @transform_10, window_bounds = array<i64: 16, 128>}]} {
    %c0 = arith.constant 0 : index
    %c0_0 = arith.constant 0 : index
    %0 = vector.load %arg7[%c0, %c0_0] : memref<3x128xf32, #tpu.memory_space<vmem>>, vector<1x128xf32>
    %c1 = arith.constant 1 : index
    %c0_1 = arith.constant 0 : index
    %1 = vector.load %arg7[%c1, %c0_1] : memref<3x128xf32, #tpu.memory_space<vmem>>, vector<1x128xf32>
    %c2 = arith.constant 2 : index
    %c0_2 = arith.constant 0 : index
    %2 = vector.load %arg7[%c2, %c0_2] : memref<3x128xf32, #tpu.memory_space<vmem>>, vector<1x128xf32>
    %c0_3 = arith.constant 0 : index
    %c0_4 = arith.constant 0 : index
    %3 = vector.load %arg1[%c0_3, %c0_4] : memref<16x256xf32, #tpu.memory_space<vmem>>, vector<16x256xf32>
    %c0_5 = arith.constant 0 : index
    %c0_6 = arith.constant 0 : index
    %4 = vector.load %arg3[%c0_5, %c0_6] : memref<256x128xbf16, #tpu.memory_space<vmem>>, vector<256x128xbf16>
    %5 = arith.truncf %3 : vector<16x256xf32> to vector<16x256xbf16>
    %cst = arith.constant dense<0.000000e+00> : vector<16x128xf32>
    %6 = tpu.matmul %5, %4, %cst {dimension_numbers = #tpu.dot_dimension_numbers<[1], [0], [0], [1], [0, 0, 1, 1], [], []>} : vector<16x256xbf16>, vector<256x128xbf16>, vector<16x128xf32> -> vector<16x128xf32>
    %7 = vector.broadcast %0 : vector<1x128xf32> to vector<16x128xf32>
    %8 = arith.addf %6, %7 : vector<16x128xf32>
    %cst_7 = arith.constant 0.000000e+00 : f32
    %9 = vector.broadcast %cst_7 : f32 to vector<16x128xf32>
    %10 = arith.maximumf %8, %9 : vector<16x128xf32>
    %c0_8 = arith.constant 0 : index
    %c0_9 = arith.constant 0 : index
    %11 = vector.load %arg2[%c0_8, %c0_9] : memref<16x1xf32, #tpu.memory_space<vmem>>, vector<16x1xf32>
    %12 = vector.broadcast %11 : vector<16x1xf32> to vector<16x128xf32>
    %13 = vector.broadcast %1 : vector<1x128xf32> to vector<16x128xf32>
    %14 = arith.mulf %12, %13 : vector<16x128xf32>
    %15 = vector.broadcast %2 : vector<1x128xf32> to vector<16x128xf32>
    %16 = arith.addf %14, %15 : vector<16x128xf32>
    %cst_10 = arith.constant 0.000000e+00 : f32
    %17 = vector.broadcast %cst_10 : f32 to vector<16x128xf32>
    %18 = arith.maximumf %16, %17 : vector<16x128xf32>
    %c0_11 = arith.constant 0 : index
    %c0_12 = arith.constant 0 : index
    %c0_13 = arith.constant 0 : index
    %19 = vector.load %arg4[%c0_11, %c0_12, %c0_13] : memref<3x128x128xbf16, #tpu.memory_space<vmem>>, vector<1x128x128xbf16>
    %20 = vector.shape_cast %19 : vector<1x128x128xbf16> to vector<128x128xbf16>
    %21 = arith.truncf %10 : vector<16x128xf32> to vector<16x128xbf16>
    %cst_14 = arith.constant dense<0.000000e+00> : vector<16x128xf32>
    %22 = tpu.matmul %21, %20, %cst_14 {dimension_numbers = #tpu.dot_dimension_numbers<[1], [0], [0], [1], [0, 0, 1, 1], [], []>} : vector<16x128xbf16>, vector<128x128xbf16>, vector<16x128xf32> -> vector<16x128xf32>
    %c0_15 = arith.constant 0 : index
    %c0_16 = arith.constant 0 : index
    %23 = vector.load %arg8[%c0_15, %c0_16] : memref<3x128xf32, #tpu.memory_space<vmem>>, vector<1x128xf32>
    %24 = vector.broadcast %23 : vector<1x128xf32> to vector<16x128xf32>
    %25 = arith.addf %22, %24 : vector<16x128xf32>
    %c0_17 = arith.constant 0 : index
    %c0_18 = arith.constant 0 : index
    %c0_19 = arith.constant 0 : index
    %26 = vector.load %arg5[%c0_17, %c0_18, %c0_19] : memref<3x128x128xbf16, #tpu.memory_space<vmem>>, vector<1x128x128xbf16>
    %27 = vector.shape_cast %26 : vector<1x128x128xbf16> to vector<128x128xbf16>
    %28 = arith.truncf %18 : vector<16x128xf32> to vector<16x128xbf16>
    %cst_20 = arith.constant dense<0.000000e+00> : vector<16x128xf32>
    %29 = tpu.matmul %28, %27, %cst_20 {dimension_numbers = #tpu.dot_dimension_numbers<[1], [0], [0], [1], [0, 0, 1, 1], [], []>} : vector<16x128xbf16>, vector<128x128xbf16>, vector<16x128xf32> -> vector<16x128xf32>
    %c0_21 = arith.constant 0 : index
    %c0_22 = arith.constant 0 : index
    %30 = vector.load %arg9[%c0_21, %c0_22] : memref<3x128xf32, #tpu.memory_space<vmem>>, vector<1x128xf32>
    %31 = vector.broadcast %30 : vector<1x128xf32> to vector<16x128xf32>
    %32 = arith.addf %29, %31 : vector<16x128xf32>
    %cst_23 = arith.constant 0.000000e+00 : f32
    %33 = vector.broadcast %cst_23 : f32 to vector<16x128xf32>
    %34 = arith.maximumf %25, %33 : vector<16x128xf32>
    %cst_24 = arith.constant 0.000000e+00 : f32
    %35 = vector.broadcast %cst_24 : f32 to vector<16x128xf32>
    %36 = arith.maximumf %32, %35 : vector<16x128xf32>
    %c1_25 = arith.constant 1 : index
    %c0_26 = arith.constant 0 : index
    %c0_27 = arith.constant 0 : index
    %37 = vector.load %arg4[%c1_25, %c0_26, %c0_27] : memref<3x128x128xbf16, #tpu.memory_space<vmem>>, vector<1x128x128xbf16>
    %38 = vector.shape_cast %37 : vector<1x128x128xbf16> to vector<128x128xbf16>
    %39 = arith.truncf %34 : vector<16x128xf32> to vector<16x128xbf16>
    %cst_28 = arith.constant dense<0.000000e+00> : vector<16x128xf32>
    %40 = tpu.matmul %39, %38, %cst_28 {dimension_numbers = #tpu.dot_dimension_numbers<[1], [0], [0], [1], [0, 0, 1, 1], [], []>} : vector<16x128xbf16>, vector<128x128xbf16>, vector<16x128xf32> -> vector<16x128xf32>
    %c1_29 = arith.constant 1 : index
    %c0_30 = arith.constant 0 : index
    %41 = vector.load %arg8[%c1_29, %c0_30] : memref<3x128xf32, #tpu.memory_space<vmem>>, vector<1x128xf32>
    %42 = vector.broadcast %41 : vector<1x128xf32> to vector<16x128xf32>
    %43 = arith.addf %40, %42 : vector<16x128xf32>
    %c1_31 = arith.constant 1 : index
    %c0_32 = arith.constant 0 : index
    %c0_33 = arith.constant 0 : index
    %44 = vector.load %arg5[%c1_31, %c0_32, %c0_33] : memref<3x128x128xbf16, #tpu.memory_space<vmem>>, vector<1x128x128xbf16>
    %45 = vector.shape_cast %44 : vector<1x128x128xbf16> to vector<128x128xbf16>
    %46 = arith.truncf %36 : vector<16x128xf32> to vector<16x128xbf16>
    %cst_34 = arith.constant dense<0.000000e+00> : vector<16x128xf32>
    %47 = tpu.matmul %46, %45, %cst_34 {dimension_numbers = #tpu.dot_dimension_numbers<[1], [0], [0], [1], [0, 0, 1, 1], [], []>} : vector<16x128xbf16>, vector<128x128xbf16>, vector<16x128xf32> -> vector<16x128xf32>
    %c1_35 = arith.constant 1 : index
    %c0_36 = arith.constant 0 : index
    %48 = vector.load %arg9[%c1_35, %c0_36] : memref<3x128xf32, #tpu.memory_space<vmem>>, vector<1x128xf32>
    %49 = vector.broadcast %48 : vector<1x128xf32> to vector<16x128xf32>
    %50 = arith.addf %47, %49 : vector<16x128xf32>
    %cst_37 = arith.constant 0.000000e+00 : f32
    %51 = vector.broadcast %cst_37 : f32 to vector<16x128xf32>
    %52 = arith.maximumf %43, %51 : vector<16x128xf32>
    %cst_38 = arith.constant 0.000000e+00 : f32
    %53 = vector.broadcast %cst_38 : f32 to vector<16x128xf32>
    %54 = arith.maximumf %50, %53 : vector<16x128xf32>
    %c2_39 = arith.constant 2 : index
    %c0_40 = arith.constant 0 : index
    %c0_41 = arith.constant 0 : index
    %55 = vector.load %arg4[%c2_39, %c0_40, %c0_41] : memref<3x128x128xbf16, #tpu.memory_space<vmem>>, vector<1x128x128xbf16>
    %56 = vector.shape_cast %55 : vector<1x128x128xbf16> to vector<128x128xbf16>
    %57 = arith.truncf %52 : vector<16x128xf32> to vector<16x128xbf16>
    %cst_42 = arith.constant dense<0.000000e+00> : vector<16x128xf32>
    %58 = tpu.matmul %57, %56, %cst_42 {dimension_numbers = #tpu.dot_dimension_numbers<[1], [0], [0], [1], [0, 0, 1, 1], [], []>} : vector<16x128xbf16>, vector<128x128xbf16>, vector<16x128xf32> -> vector<16x128xf32>
    %c2_43 = arith.constant 2 : index
    %c0_44 = arith.constant 0 : index
    %59 = vector.load %arg8[%c2_43, %c0_44] : memref<3x128xf32, #tpu.memory_space<vmem>>, vector<1x128xf32>
    %60 = vector.broadcast %59 : vector<1x128xf32> to vector<16x128xf32>
    %61 = arith.addf %58, %60 : vector<16x128xf32>
    %c2_45 = arith.constant 2 : index
    %c0_46 = arith.constant 0 : index
    %c0_47 = arith.constant 0 : index
    %62 = vector.load %arg5[%c2_45, %c0_46, %c0_47] : memref<3x128x128xbf16, #tpu.memory_space<vmem>>, vector<1x128x128xbf16>
    %63 = vector.shape_cast %62 : vector<1x128x128xbf16> to vector<128x128xbf16>
    %64 = arith.truncf %54 : vector<16x128xf32> to vector<16x128xbf16>
    %cst_48 = arith.constant dense<0.000000e+00> : vector<16x128xf32>
    %65 = tpu.matmul %64, %63, %cst_48 {dimension_numbers = #tpu.dot_dimension_numbers<[1], [0], [0], [1], [0, 0, 1, 1], [], []>} : vector<16x128xbf16>, vector<128x128xbf16>, vector<16x128xf32> -> vector<16x128xf32>
    %c2_49 = arith.constant 2 : index
    %c0_50 = arith.constant 0 : index
    %66 = vector.load %arg9[%c2_49, %c0_50] : memref<3x128xf32, #tpu.memory_space<vmem>>, vector<1x128xf32>
    %67 = vector.broadcast %66 : vector<1x128xf32> to vector<16x128xf32>
    %68 = arith.addf %65, %67 : vector<16x128xf32>
    %69 = arith.mulf %61, %68 : vector<16x128xf32>
    %c0_51 = arith.constant 0 : index
    %c0_52 = arith.constant 0 : index
    %70 = vector.load %arg6[%c0_51, %c0_52] : memref<128x128xbf16, #tpu.memory_space<vmem>>, vector<128x128xbf16>
    %71 = arith.truncf %69 : vector<16x128xf32> to vector<16x128xbf16>
    %cst_53 = arith.constant dense<0.000000e+00> : vector<16x128xf32>
    %72 = tpu.matmul %71, %70, %cst_53 {dimension_numbers = #tpu.dot_dimension_numbers<[1], [0], [0], [1], [0, 0, 1, 1], [], []>} : vector<16x128xbf16>, vector<128x128xbf16>, vector<16x128xf32> -> vector<16x128xf32>
    %c0_54 = arith.constant 0 : index
    %c0_55 = arith.constant 0 : index
    %73 = vector.load %arg10[%c0_54, %c0_55] : memref<1x128xf32, #tpu.memory_space<vmem>>, vector<1x128xf32>
    %74 = vector.broadcast %73 : vector<1x128xf32> to vector<16x128xf32>
    %75 = arith.addf %72, %74 : vector<16x128xf32>
    %c0_56 = arith.constant 0 : index
    %c0_57 = arith.constant 0 : index
    %76 = vector.load %arg11[%c0_56, %c0_57] : memref<16x128xf32, #tpu.memory_space<vmem>>, vector<16x128xf32>
    tpu.vector_store %arg11[%c0_56, %c0_57], %75 {strides = array<i32>} : memref<16x128xf32, #tpu.memory_space<vmem>>, vector<16x128xf32>,
    return
  }
  func.func @transform_0(%arg0: i32) -> (i32, i32) {
    %c0_i32 = arith.constant 0 : i32
    %c0_i32_0 = arith.constant 0 : i32
    return %arg0, %c0_i32 : i32, i32
  }
  func.func @transform_1(%arg0: i32) -> (i32, i32) {
    %c0_i32 = arith.constant 0 : i32
    %c0_i32_0 = arith.constant 0 : i32
    return %arg0, %c0_i32 : i32, i32
  }
  func.func @transform_2(%arg0: i32) -> (i32, i32) {
    %c0_i32 = arith.constant 0 : i32
    %c0_i32_0 = arith.constant 0 : i32
    %c0_i32_1 = arith.constant 0 : i32
    return %c0_i32, %c0_i32_0 : i32, i32
  }
  func.func @transform_3(%arg0: i32) -> (i32, i32, i32) {
    %c0_i32 = arith.constant 0 : i32
    %c0_i32_0 = arith.constant 0 : i32
    %c0_i32_1 = arith.constant 0 : i32
    %c0_i32_2 = arith.constant 0 : i32
    return %c0_i32, %c0_i32_0, %c0_i32_1 : i32, i32, i32
  }
  func.func @transform_4(%arg0: i32) -> (i32, i32, i32) {
    %c0_i32 = arith.constant 0 : i32
    %c0_i32_0 = arith.constant 0 : i32
    %c0_i32_1 = arith.constant 0 : i32
    %c0_i32_2 = arith.constant 0 : i32
    return %c0_i32, %c0_i32_0, %c0_i32_1 : i32, i32, i32
  }
  func.func @transform_5(%arg0: i32) -> (i32, i32) {
    %c0_i32 = arith.constant 0 : i32
    %c0_i32_0 = arith.constant 0 : i32
    %c0_i32_1 = arith.constant 0 : i32
    return %c0_i32, %c0_i32_0 : i32, i32
  }
  func.func @transform_6(%arg0: i32) -> (i32, i32) {
    %c0_i32 = arith.constant 0 : i32
    %c0_i32_0 = arith.constant 0 : i32
    %c0_i32_1 = arith.constant 0 : i32
    return %c0_i32, %c0_i32_0 : i32, i32
  }
  func.func @transform_7(%arg0: i32) -> (i32, i32) {
    %c0_i32 = arith.constant 0 : i32
    %c0_i32_0 = arith.constant 0 : i32
    %c0_i32_1 = arith.constant 0 : i32
    return %c0_i32, %c0_i32_0 : i32, i32
  }
  func.func @transform_8(%arg0: i32) -> (i32, i32) {
    %c0_i32 = arith.constant 0 : i32
    %c0_i32_0 = arith.constant 0 : i32
    %c0_i32_1 = arith.constant 0 : i32
    return %c0_i32, %c0_i32_0 : i32, i32
  }
  func.func @transform_9(%arg0: i32) -> (i32, i32) {
    %c0_i32 = arith.constant 0 : i32
    %c0_i32_0 = arith.constant 0 : i32
    %c0_i32_1 = arith.constant 0 : i32
    return %c0_i32, %c0_i32_0 : i32, i32
  }
  func.func @transform_10(%arg0: i32) -> (i32, i32) {
    %c0_i32 = arith.constant 0 : i32
    %c0_i32_0 = arith.constant 0 : i32
    return %arg0, %c0_i32 : i32, i32
  }
}

</mosaic_0001>

<llo_original>
// kernel: tpu_custom_call.1
$region0: #{tpu_custom_call.1}
  #allocation0 [shape = 'u32[]', space=smem, size = 0x4, offset = 0x4, fixed_abs, tag = 'smem constant byte address 0x4 - core index']
  #allocation1 [shape = 'u32[72,128]{1,0:T(1,128)}', space=vmem, size = 0x9000, scoped, tag = 'internal scratch']
  %s0 = inlined_call_operand.hbm [shape: f32[16,256], index: 0, kind: input, shape index: {}]
  %s1 = inlined_call_operand.vmem [shape: f32[16,1], index: 1, kind: input, shape index: {}]
  %s2 = inlined_call_operand.hbm [shape: bf16[256,128], index: 2, kind: input, shape index: {}]
  %s3 = inlined_call_operand.hbm [shape: bf16[3,128,128], index: 3, kind: input, shape index: {}]
  %s4 = inlined_call_operand.hbm [shape: bf16[3,128,128], index: 4, kind: input, shape index: {}]
  %s5 = inlined_call_operand.hbm [shape: bf16[128,128], index: 5, kind: input, shape index: {}]
  %s6 = inlined_call_operand.vmem [shape: f32[3,128], index: 6, kind: input, shape index: {}]
  %s7 = inlined_call_operand.vmem [shape: f32[3,128], index: 7, kind: input, shape index: {}]
  %s8 = inlined_call_operand.vmem [shape: f32[3,128], index: 8, kind: input, shape index: {}]
  %s9 = inlined_call_operand.vmem [shape: f32[1,128], index: 9, kind: input, shape index: {}]
  %s10 = inlined_call_operand.hbm [shape: f32[16,128], index: 10, kind: output, shape index: {}]
  %s11 = sld [smem:[#allocation0]]
  $region70: #{tpu_custom_call.1} parent=0
    _
  %s13 = ssub.s32 1, %s11
  %s14 = scalar_select 0, %s13, %s11
  $region1: #{tpu_custom_call.1} parent=0
    #allocation2 [shape = 'u8[16384]{0}', space=vmem, size = 0x4000, scoped, tag = 'input window, operand 0, single buffered']
    #allocation3 [shape = 's32[1]{0}', space=sflag, size = 0x4, scoped, tag = 'scoped memory for tpu_custom_call.1']
    #allocation4 [shape = 's32[1]{0}', space=sflag, size = 0x4, scoped, tag = 'scoped memory for tpu_custom_call.1']
    #allocation5 [shape = 'u8[65536]{0}', space=vmem, size = 0x10000, scoped, tag = 'input window, operand 2, single buffered']
    #allocation6 [shape = 's32[1]{0}', space=sflag, size = 0x4, scoped, tag = 'scoped memory for tpu_custom_call.1']
    #allocation7 [shape = 'u8[98304]{0}', space=vmem, size = 0x18000, scoped, tag = 'input window, operand 3, single buffered']
    #allocation8 [shape = 'u8[98304]{0}', space=vmem, size = 0x18000, scoped, tag = 'input window, operand 4, single buffered']
    #allocation9 [shape = 's32[1]{0}', space=sflag, size = 0x4, scoped, tag = 'scoped memory for tpu_custom_call.1']
    #allocation10 [shape = 'u8[32768]{0}', space=vmem, size = 0x8000, scoped, tag = 'input window, operand 5, single buffered']
    #allocation11 [shape = 'u8[8192]{0}', space=vmem, size = 0x2000, scoped, tag = 'output window, operand 0, single buffered']
    %15 = vsyncpa [#allocation3], 0
    %16 = vsyncpa [#allocation6], 0
    %17 = vsyncpa [#allocation9], 0
    %18 = vsyncpa [#allocation4], 0
    // Predicated region
    $region2: #{tpu_custom_call.1} parent=1 // pred_check
      _
    $region3: #{tpu_custom_call.1} parent=1 // pred_check_branch
      %20 = sbr.rel (0) target = $region5
    $region4: #{tpu_custom_call.1} parent=1 // pred_region
      %22 = vsyncadd [#allocation3], 0
      %s23 = sshll.u32 %s0, 4
      %s24 = int_to_ptr.hbm [resolvable:$true] %s23
      %s25 = sshll.u32 [#allocation2], 4
      %s26 = int_to_ptr.vmem [resolvable:$true] %s25
      %31 = dma.hbm_to_vmem [thread:$0]  %s24, 512, %s26, [#allocation3], 256, 256, 16
    $region5: #{tpu_custom_call.1} parent=1 // pred_fallthru
      _
    // Predicated region
    $region6: #{tpu_custom_call.1} parent=1 // pred_check
      _
    $region7: #{tpu_custom_call.1} parent=1 // pred_check_branch
      %33 = sbr.rel (0) target = $region9
    $region8: #{tpu_custom_call.1} parent=1 // pred_region
      _
    $region9: #{tpu_custom_call.1} parent=1 // pred_fallthru
      _
    // Predicated region
    $region10: #{tpu_custom_call.1} parent=1 // pred_check
      _
    $region11: #{tpu_custom_call.1} parent=1 // pred_check_branch
      %35 = sbr.rel (0) target = $region13
    $region12: #{tpu_custom_call.1} parent=1 // pred_region
      %37 = vsyncadd [#allocation6], 0
      %s38 = sshll.u32 %s2, 4
      %s39 = int_to_ptr.hbm [resolvable:$true] %s38
      %s40 = sshll.u32 [#allocation5], 4
      %s41 = int_to_ptr.vmem [resolvable:$true] %s40
      %46 = dma.hbm_to_vmem [thread:$0]  %s39, 2048, %s41, [#allocation6], 64, 64, 4
    $region13: #{tpu_custom_call.1} parent=1 // pred_fallthru
      _
    // Predicated region
    $region14: #{tpu_custom_call.1} parent=1 // pred_check
      _
    $region15: #{tpu_custom_call.1} parent=1 // pred_check_branch
      %48 = sbr.rel (0) target = $region17
    $region16: #{tpu_custom_call.1} parent=1 // pred_region
      %50 = vsyncadd [#allocation6], 0
      %s51 = sshll.u32 %s3, 4
      %s52 = int_to_ptr.hbm [resolvable:$true] %s51
      %s53 = sshll.u32 [#allocation7], 4
      %s54 = int_to_ptr.vmem [resolvable:$true] %s53
      %59 = dma.hbm_to_vmem [thread:$0]  %s52, 3072, %s54, [#allocation6], 64, 64, 4
    $region17: #{tpu_custom_call.1} parent=1 // pred_fallthru
      _
    // Predicated region
    $region18: #{tpu_custom_call.1} parent=1 // pred_check
      _
    $region19: #{tpu_custom_call.1} parent=1 // pred_check_branch
      %61 = sbr.rel (0) target = $region21
    $region20: #{tpu_custom_call.1} parent=1 // pred_region
      %63 = vsyncadd [#allocation9], 0
      %s64 = sshll.u32 %s4, 4
      %s65 = int_to_ptr.hbm [resolvable:$true] %s64
      %s66 = sshll.u32 [#allocation8], 4
      %s67 = int_to_ptr.vmem [resolvable:$true] %s66
      %72 = dma.hbm_to_vmem [thread:$0]  %s65, 3072, %s67, [#allocation9], 64, 64, 4
    $region21: #{tpu_custom_call.1} parent=1 // pred_fallthru
      _
    // Predicated region
    $region22: #{tpu_custom_call.1} parent=1 // pred_check
      _
    $region23: #{tpu_custom_call.1} parent=1 // pred_check_branch
      %74 = sbr.rel (0) target = $region25
    $region24: #{tpu_custom_call.1} parent=1 // pred_region
      %76 = vsyncadd [#allocation9], 0
      %s77 = sshll.u32 %s5, 4
      %s78 = int_to_ptr.hbm [resolvable:$true] %s77
      %s79 = sshll.u32 [#allocation10], 4
      %s80 = int_to_ptr.vmem [resolvable:$true] %s79
      %85 = dma.hbm_to_vmem [thread:$0]  %s78, 1024, %s80, [#allocation9], 64, 64, 4
    $region25: #{tpu_custom_call.1} parent=1 // pred_fallthru
      _
    // Predicated region
    $region26: #{tpu_custom_call.1} parent=1 // pred_check
      _
    $region27: #{tpu_custom_call.1} parent=1 // pred_check_branch
      %87 = sbr.rel (0) target = $region29
    $region28: #{tpu_custom_call.1} parent=1 // pred_region
      _
    $region29: #{tpu_custom_call.1} parent=1 // pred_fallthru
      _
    // Predicated region
    $region30: #{tpu_custom_call.1} parent=1 // pred_check
      _
    $region31: #{tpu_custom_call.1} parent=1 // pred_check_branch
      %89 = sbr.rel (0) target = $region33
    $region32: #{tpu_custom_call.1} parent=1 // pred_region
      _
    $region33: #{tpu_custom_call.1} parent=1 // pred_fallthru
      _
    // Predicated region
    $region34: #{tpu_custom_call.1} parent=1 // pred_check
      _
    $region35: #{tpu_custom_call.1} parent=1 // pred_check_branch
      %91 = sbr.rel (0) target = $region37
    $region36: #{tpu_custom_call.1} parent=1 // pred_region
      _
    $region37: #{tpu_custom_call.1} parent=1 // pred_fallthru
      _
    // Predicated region
    $region38: #{tpu_custom_call.1} parent=1 // pred_check
      _
    $region39: #{tpu_custom_call.1} parent=1 // pred_check_branch
      %93 = sbr.rel (0) target = $region41
    $region40: #{tpu_custom_call.1} parent=1 // pred_region
      _
    $region41: #{tpu_custom_call.1} parent=1 // pred_fallthru
      _
    // Predicated region
    $region42: #{tpu_custom_call.1} parent=1 // pred_check
      _
    $region43: #{tpu_custom_call.1} parent=1 // pred_check_branch
      %95 = sbr.rel (0) target = $region45
    $region44: #{tpu_custom_call.1} parent=1 // pred_region
      %97 = dma.done [#allocation3], 512
    $region45: #{tpu_custom_call.1} parent=1 // pred_fallthru
      _
    // Predicated region
    $region46: #{tpu_custom_call.1} parent=1 // pred_check
      _
    $region47: #{tpu_custom_call.1} parent=1 // pred_check_branch
      %99 = sbr.rel (0) target = $region49
    $region48: #{tpu_custom_call.1} parent=1 // pred_region
      %101 = dma.done [#allocation6], 2048
    $region49: #{tpu_custom_call.1} parent=1 // pred_fallthru
      _
    // Predicated region
    $region50: #{tpu_custom_call.1} parent=1 // pred_check
      _
    $region51: #{tpu_custom_call.1} parent=1 // pred_check_branch
      %103 = sbr.rel (0) target = $region53
    $region52: #{tpu_custom_call.1} parent=1 // pred_region
      %105 = dma.done [#allocation6], 3072
    $region53: #{tpu_custom_call.1} parent=1 // pred_fallthru
      _
    // Predicated region
    $region54: #{tpu_custom_call.1} parent=1 // pred_check
      _
    $region55: #{tpu_custom_call.1} parent=1 // pred_check_branch
      %107 = sbr.rel (0) target = $region57
    $region56: #{tpu_custom_call.1} parent=1 // pred_region
      %109 = dma.done [#allocation9], 3072
    $region57: #{tpu_custom_call.1} parent=1 // pred_fallthru
      _
    // Predicated region
    $region58: #{tpu_custom_call.1} parent=1 // pred_check
      _
    $region59: #{tpu_custom_call.1} parent=1 // pred_check_branch
      %111 = sbr.rel (0) target = $region61
    $region60: #{tpu_custom_call.1} parent=1 // pred_region
      %113 = dma.done [#allocation9], 1024
    $region61: #{tpu_custom_call.1} parent=1 // pred_fallthru
      _
    %v114 = vld [vmem:[%s6] sm:$0x1]
    %v115 = vld [vmem:[%s6 + $0x1] sm:$0x1]
    %v116 = vld [vmem:[%s6 + $0x2] sm:$0x1]
    %v117 = vld [vmem:[#allocation2] sm:$0xff]
    %v118 = vld [vmem:[#allocation2 + $0x8] sm:$0xff]
    %v119 = vld [vmem:[#allocation2 + $0x10] sm:$0xff]
    %v120 = vld [vmem:[#allocation2 + $0x18] sm:$0xff]
    %v121 = vld [vmem:[#allocation5] sm:$0xf]
    %v122 = vld [vmem:[#allocation5 + $0x4] sm:$0xf]
    %v123 = vld [vmem:[#allocation5 + $0x8] sm:$0xf]
    %v124 = vld [vmem:[#allocation5 + $0xc] sm:$0xf]
    %v125 = vld [vmem:[#allocation5 + $0x10] sm:$0xf]
    %v126 = vld [vmem:[#allocation5 + $0x14] sm:$0xf]
    %v127 = vld [vmem:[#allocation5 + $0x18] sm:$0xf]
    %v128 = vld [vmem:[#allocation5 + $0x1c] sm:$0xf]
    %v129 = vld [vmem:[#allocation5 + $0x20] sm:$0xf]
    %v130 = vld [vmem:[#allocation5 + $0x24] sm:$0xf]
    %v131 = vld [vmem:[#allocation5 + $0x28] sm:$0xf]
    %v132 = vld [vmem:[#allocation5 + $0x2c] sm:$0xf]
    %v133 = vld [vmem:[#allocation5 + $0x30] sm:$0xf]
    %v134 = vld [vmem:[#allocation5 + $0x34] sm:$0xf]
    %v135 = vld [vmem:[#allocation5 + $0x38] sm:$0xf]
    %v136 = vld [vmem:[#allocation5 + $0x3c] sm:$0xf]
    %v137 = vld [vmem:[#allocation5 + $0x40] sm:$0xf]
    %v138 = vld [vmem:[#allocation5 + $0x44] sm:$0xf]
    %v139 = vld [vmem:[#allocation5 + $0x48] sm:$0xf]
    %v140 = vld [vmem:[#allocation5 + $0x4c] sm:$0xf]
    %v141 = vld [vmem:[#allocation5 + $0x50] sm:$0xf]
    %v142 = vld [vmem:[#allocation5 + $0x54] sm:$0xf]
    %v143 = vld [vmem:[#allocation5 + $0x58] sm:$0xf]
    %v144 = vld [vmem:[#allocation5 + $0x5c] sm:$0xf]
    %v145 = vld [vmem:[#allocation5 + $0x60] sm:$0xf]
    %v146 = vld [vmem:[#allocation5 + $0x64] sm:$0xf]
    %v147 = vld [vmem:[#allocation5 + $0x68] sm:$0xf]
    %v148 = vld [vmem:[#allocation5 + $0x6c] sm:$0xf]
    %v149 = vld [vmem:[#allocation5 + $0x70] sm:$0xf]
    %v150 = vld [vmem:[#allocation5 + $0x74] sm:$0xf]
    %v151 = vld [vmem:[#allocation5 + $0x78] sm:$0xf]
    %v152 = vld [vmem:[#allocation5 + $0x7c] sm:$0xf]
    %v153 = vpack.c.bf16 %v119, %v117
    %v154 = vpack.c.bf16 %v120, %v118
    %v155 = vperm.slane %v114, 0
    %v188 = vunpack.c.l.b16 %v121
    %v189 = vunpack.c.l.b16 %v122
    %v190 = vunpack.c.l.b16 %v123
    %v191 = vunpack.c.l.b16 %v124
    %v192 = vunpack.c.l.b16 %v125
    %v193 = vunpack.c.l.b16 %v126
    %v194 = vunpack.c.l.b16 %v127
    %v195 = vunpack.c.l.b16 %v128
    %v196 = vunpack.c.l.b16 %v129
    %v197 = vunpack.c.l.b16 %v130
    %v198 = vunpack.c.l.b16 %v131
    %v199 = vunpack.c.l.b16 %v132
    %v200 = vunpack.c.l.b16 %v133
    %v201 = vunpack.c.l.b16 %v134
    %v202 = vunpack.c.l.b16 %v135
    %v203 = vunpack.c.l.b16 %v136
    %v204 = vunpack.c.l.b16 %v137
    %v205 = vunpack.c.l.b16 %v138
    %v206 = vunpack.c.l.b16 %v139
    %v207 = vunpack.c.l.b16 %v140
    %v208 = vunpack.c.l.b16 %v141
    %v209 = vunpack.c.l.b16 %v142
    %v210 = vunpack.c.l.b16 %v143
    %v211 = vunpack.c.l.b16 %v144
    %v212 = vunpack.c.l.b16 %v145
    %v213 = vunpack.c.l.b16 %v146
    %v214 = vunpack.c.l.b16 %v147
    %v215 = vunpack.c.l.b16 %v148
    %v216 = vunpack.c.l.b16 %v149
    %v217 = vunpack.c.l.b16 %v150
    %v218 = vunpack.c.l.b16 %v151
    %v219 = vunpack.c.l.b16 %v152
    %v220 = vpack.c.b16 %v189, %v188
    %v221 = vpack.c.b16 %v191, %v190
    %v222 = vpack.c.b16 %v193, %v192
    %v223 = vpack.c.b16 %v195, %v194
    %v224 = vpack.c.b16 %v197, %v196
    %v225 = vpack.c.b16 %v199, %v198
    %v226 = vpack.c.b16 %v201, %v200
    %v227 = vpack.c.b16 %v203, %v202
    %v228 = vpack.c.b16 %v205, %v204
    %v229 = vpack.c.b16 %v207, %v206
    %v230 = vpack.c.b16 %v209, %v208
    %v231 = vpack.c.b16 %v211, %v210
    %v232 = vpack.c.b16 %v213, %v212
    %v233 = vpack.c.b16 %v215, %v214
    %v234 = vpack.c.b16 %v217, %v216
    %v235 = vpack.c.b16 %v219, %v218
    %252 = vmatpush.bf16.msra.mxu0 %v227
    %253 = vmatpush.bf16.msra.mxu0 %v226
    %254 = vmatpush.bf16.msra.mxu0 %v225
    %255 = vmatpush.bf16.msra.mxu0 %v224
    %256 = vmatpush.bf16.msra.mxu0 %v223
    %257 = vmatpush.bf16.msra.mxu0 %v222
    %258 = vmatpush.bf16.msra.mxu0 %v221
    %259 = vmatpush.bf16.msra.mxu0 %v220
    %260 = vmatmul.bf16.gmra.mxu0 %v153
    %v261 = vpop.f32.mrf.mxu0
    %v262 = vadd.f32 %v155, %v261
    %v263 = vpop.f32.mrf.mxu0
    %v264 = vadd.f32 %v155, %v263
    %265 = vdwg.mxu0
    %266 = vmatpush.bf16.msra.mxu0 %v235
    %267 = vmatpush.bf16.msra.mxu0 %v234
    %268 = vmatpush.bf16.msra.mxu0 %v233
    %269 = vmatpush.bf16.msra.mxu0 %v232
    %270 = vmatpush.bf16.msra.mxu0 %v231
    %271 = vmatpush.bf16.msra.mxu0 %v230
    %272 = vmatpush.bf16.msra.mxu0 %v229
    %273 = vmatpush.bf16.msra.mxu0 %v228
    %274 = vmatmul.bf16.gmra.mxu0 %v154
    %v275 = vpop.f32.mrf.mxu0
    %v276 = vadd.f32 %v262, %v275
    %v277 = vpop.f32.mrf.mxu0
    %v278 = vadd.f32 %v264, %v277
    %279 = vdwg.mxu0
    %v280 = vmax.f32 %v276, 0.0
    %v281 = vmax.f32 %v278, 0.0
    %v282 = vld [vmem:[%s1] sm:$0xff]
    %v283 = vld [vmem:[%s1 + $0x8] sm:$0xff]
    %285 = vset.pattern.permute.xlu0 0
    %286 = vperm.xlu0 %285, %v282
    %v287 = vpop.permute.xlu0 %286
    %290 = vset.pattern.permute.xlu0 0
    %291 = vperm.xlu0 %290, %v283
    %v292 = vpop.permute.xlu0 %291
    %v294 = vperm.slane %v115, 0
    %v295 = vmul.f32 %v287, %v294
    %v296 = vmul.f32 %v292, %v294
    %v297 = vperm.slane %v116, 0
    %v298 = vadd.f32 %v295, %v297
    %v299 = vadd.f32 %v296, %v297
    %v300 = vmax.f32 %v298, 0.0
    %v301 = vmax.f32 %v299, 0.0
    %v302 = vld [vmem:[#allocation7] sm:$0xf]
    %v303 = vld [vmem:[#allocation7 + $0x4] sm:$0xf]
    %v304 = vld [vmem:[#allocation7 + $0x8] sm:$0xf]
    %v305 = vld [vmem:[#allocation7 + $0xc] sm:$0xf]
    %v306 = vld [vmem:[#allocation7 + $0x10] sm:$0xf]
    %v307 = vld [vmem:[#allocation7 + $0x14] sm:$0xf]
    %v308 = vld [vmem:[#allocation7 + $0x18] sm:$0xf]
    %v309 = vld [vmem:[#allocation7 + $0x1c] sm:$0xf]
    %v310 = vld [vmem:[#allocation7 + $0x20] sm:$0xf]
    %v311 = vld [vmem:[#allocation7 + $0x24] sm:$0xf]
    %v312 = vld [vmem:[#allocation7 + $0x28] sm:$0xf]
    %v313 = vld [vmem:[#allocation7 + $0x2c] sm:$0xf]
    %v314 = vld [vmem:[#allocation7 + $0x30] sm:$0xf]
    %v315 = vld [vmem:[#allocation7 + $0x34] sm:$0xf]
    %v316 = vld [vmem:[#allocation7 + $0x38] sm:$0xf]
    %v317 = vld [vmem:[#allocation7 + $0x3c] sm:$0xf]
    %v318 = vpack.c.bf16 %v281, %v280
    %v319 = vld [vmem:[%s7] sm:$0x1]
    %v320 = vperm.slane %v319, 0
    %v337 = vunpack.c.l.b16 %v302
    %v338 = vunpack.c.l.b16 %v303
    %v339 = vunpack.c.l.b16 %v304
    %v340 = vunpack.c.l.b16 %v305
    %v341 = vunpack.c.l.b16 %v306
    %v342 = vunpack.c.l.b16 %v307
    %v343 = vunpack.c.l.b16 %v308
    %v344 = vunpack.c.l.b16 %v309
    %v345 = vunpack.c.l.b16 %v310
    %v346 = vunpack.c.l.b16 %v311
    %v347 = vunpack.c.l.b16 %v312
    %v348 = vunpack.c.l.b16 %v313
    %v349 = vunpack.c.l.b16 %v314
    %v350 = vunpack.c.l.b16 %v315
    %v351 = vunpack.c.l.b16 %v316
    %v352 = vunpack.c.l.b16 %v317
    %v353 = vpack.c.b16 %v338, %v337
    %v354 = vpack.c.b16 %v340, %v339
    %v355 = vpack.c.b16 %v342, %v341
    %v356 = vpack.c.b16 %v344, %v343
    %v357 = vpack.c.b16 %v346, %v345
    %v358 = vpack.c.b16 %v348, %v347
    %v359 = vpack.c.b16 %v350, %v349
    %v360 = vpack.c.b16 %v352, %v351
    %369 = vmatpush.bf16.msra.mxu0 %v360
    %370 = vmatpush.bf16.msra.mxu0 %v359
    %371 = vmatpush.bf16.msra.mxu0 %v358
    %372 = vmatpush.bf16.msra.mxu0 %v357
    %373 = vmatpush.bf16.msra.mxu0 %v356
    %374 = vmatpush.bf16.msra.mxu0 %v355
    %375 = vmatpush.bf16.msra.mxu0 %v354
    %376 = vmatpush.bf16.msra.mxu0 %v353
    %377 = vmatmul.bf16.gmra.mxu0 %v318
    %v378 = vpop.f32.mrf.mxu0
    %v379 = vadd.f32 %v320, %v378
    %v380 = vpop.f32.mrf.mxu0
    %v381 = vadd.f32 %v320, %v380
    %382 = vdwg.mxu0
    %v383 = vld [vmem:[#allocation8] sm:$0xf]
    %v384 = vld [vmem:[#allocation8 + $0x4] sm:$0xf]
    %v385 = vld [vmem:[#allocation8 + $0x8] sm:$0xf]
    %v386 = vld [vmem:[#allocation8 + $0xc] sm:$0xf]
    %v387 = vld [vmem:[#allocation8 + $0x10] sm:$0xf]
    %v388 = vld [vmem:[#allocation8 + $0x14] sm:$0xf]
    %v389 = vld [vmem:[#allocation8 + $0x18] sm:$0xf]
    %v390 = vld [vmem:[#allocation8 + $0x1c] sm:$0xf]
    %v391 = vld [vmem:[#allocation8 + $0x20] sm:$0xf]
    %v392 = vld [vmem:[#allocation8 + $0x24] sm:$0xf]
    %v393 = vld [vmem:[#allocation8 + $0x28] sm:$0xf]
    %v394 = vld [vmem:[#allocation8 + $0x2c] sm:$0xf]
    %v395 = vld [vmem:[#allocation8 + $0x30] sm:$0xf]
    %v396 = vld [vmem:[#allocation8 + $0x34] sm:$0xf]
    %v397 = vld [vmem:[#allocation8 + $0x38] sm:$0xf]
    %v398 = vld [vmem:[#allocation8 + $0x3c] sm:$0xf]
    %v399 = vpack.c.bf16 %v301, %v300
    %v400 = vld [vmem:[%s8] sm:$0x1]
    %v401 = vperm.slane %v400, 0
    %v418 = vunpack.c.l.b16 %v383
    %v419 = vunpack.c.l.b16 %v384
    %v420 = vunpack.c.l.b16 %v385
    %v421 = vunpack.c.l.b16 %v386
    %v422 = vunpack.c.l.b16 %v387
    %v423 = vunpack.c.l.b16 %v388
    %v424 = vunpack.c.l.b16 %v389
    %v425 = vunpack.c.l.b16 %v390
    %v426 = vunpack.c.l.b16 %v391
    %v427 = vunpack.c.l.b16 %v392
    %v428 = vunpack.c.l.b16 %v393
    %v429 = vunpack.c.l.b16 %v394
    %v430 = vunpack.c.l.b16 %v395
    %v431 = vunpack.c.l.b16 %v396
    %v432 = vunpack.c.l.b16 %v397
    %v433 = vunpack.c.l.b16 %v398
    %v434 = vpack.c.b16 %v419, %v418
    %v435 = vpack.c.b16 %v421, %v420
    %v436 = vpack.c.b16 %v423, %v422
    %v437 = vpack.c.b16 %v425, %v424
    %v438 = vpack.c.b16 %v427, %v426
    %v439 = vpack.c.b16 %v429, %v428
    %v440 = vpack.c.b16 %v431, %v430
    %v441 = vpack.c.b16 %v433, %v432
    %450 = vmatpush.bf16.msra.mxu0 %v441
    %451 = vmatpush.bf16.msra.mxu0 %v440
    %452 = vmatpush.bf16.msra.mxu0 %v439
    %453 = vmatpush.bf16.msra.mxu0 %v438
    %454 = vmatpush.bf16.msra.mxu0 %v437
    %455 = vmatpush.bf16.msra.mxu0 %v436
    %456 = vmatpush.bf16.msra.mxu0 %v435
    %457 = vmatpush.bf16.msra.mxu0 %v434
    %458 = vmatmul.bf16.gmra.mxu0 %v399
    %v459 = vpop.f32.mrf.mxu0
    %v460 = vadd.f32 %v401, %v459
    %v461 = vpop.f32.mrf.mxu0
    %v462 = vadd.f32 %v401, %v461
    %463 = vdwg.mxu0
    %v464 = vmax.f32 %v379, 0.0
    %v465 = vmax.f32 %v381, 0.0
    %v466 = vmax.f32 %v460, 0.0
    %v467 = vmax.f32 %v462, 0.0
    %s468 = scalar_lea.vmem [#allocation7], 64
    %v469 = vld [vmem:[%s468] sm:$0xf]
    %v470 = vld [vmem:[%s468 + $0x4] sm:$0xf]
    %v471 = vld [vmem:[%s468 + $0x8] sm:$0xf]
    %v472 = vld [vmem:[%s468 + $0xc] sm:$0xf]
    %v473 = vld [vmem:[%s468 + $0x10] sm:$0xf]
    %v474 = vld [vmem:[%s468 + $0x14] sm:$0xf]
    %v475 = vld [vmem:[%s468 + $0x18] sm:$0xf]
    %v476 = vld [vmem:[%s468 + $0x1c] sm:$0xf]
    %v477 = vld [vmem:[%s468 + $0x20] sm:$0xf]
    %v478 = vld [vmem:[%s468 + $0x24] sm:$0xf]
    %v479 = vld [vmem:[%s468 + $0x28] sm:$0xf]
    %v480 = vld [vmem:[%s468 + $0x2c] sm:$0xf]
    %v481 = vld [vmem:[%s468 + $0x30] sm:$0xf]
    %v482 = vld [vmem:[%s468 + $0x34] sm:$0xf]
    %v483 = vld [vmem:[%s468 + $0x38] sm:$0xf]
    %v484 = vld [vmem:[%s468 + $0x3c] sm:$0xf]
    %v485 = vpack.c.bf16 %v465, %v464
    %v486 = vld [vmem:[%s7 + $0x1] sm:$0x1]
    %v487 = vperm.slane %v486, 0
    %v504 = vunpack.c.l.b16 %v469
    %v505 = vunpack.c.l.b16 %v470
    %v506 = vunpack.c.l.b16 %v471
    %v507 = vunpack.c.l.b16 %v472
    %v508 = vunpack.c.l.b16 %v473
    %v509 = vunpack.c.l.b16 %v474
    %v510 = vunpack.c.l.b16 %v475
    %v511 = vunpack.c.l.b16 %v476
    %v512 = vunpack.c.l.b16 %v477
    %v513 = vunpack.c.l.b16 %v478
    %v514 = vunpack.c.l.b16 %v479
    %v515 = vunpack.c.l.b16 %v480
    %v516 = vunpack.c.l.b16 %v481
    %v517 = vunpack.c.l.b16 %v482
    %v518 = vunpack.c.l.b16 %v483
    %v519 = vunpack.c.l.b16 %v484
    %v520 = vpack.c.b16 %v505, %v504
    %v521 = vpack.c.b16 %v507, %v506
    %v522 = vpack.c.b16 %v509, %v508
    %v523 = vpack.c.b16 %v511, %v510
    %v524 = vpack.c.b16 %v513, %v512
    %v525 = vpack.c.b16 %v515, %v514
    %v526 = vpack.c.b16 %v517, %v516
    %v527 = vpack.c.b16 %v519, %v518
    %536 = vmatpush.bf16.msra.mxu0 %v527
    %537 = vmatpush.bf16.msra.mxu0 %v526
    %538 = vmatpush.bf16.msra.mxu0 %v525
    %539 = vmatpush.bf16.msra.mxu0 %v524
    %540 = vmatpush.bf16.msra.mxu0 %v523
    %541 = vmatpush.bf16.msra.mxu0 %v522
    %542 = vmatpush.bf16.msra.mxu0 %v521
    %543 = vmatpush.bf16.msra.mxu0 %v520
    %544 = vmatmul.bf16.gmra.mxu0 %v485
    %v545 = vpop.f32.mrf.mxu0
    %v546 = vadd.f32 %v487, %v545
    %v547 = vpop.f32.mrf.mxu0
    %v548 = vadd.f32 %v487, %v547
    %549 = vdwg.mxu0
    %s550 = scalar_lea.vmem [#allocation8], 64
    %v551 = vld [vmem:[%s550] sm:$0xf]
    %v552 = vld [vmem:[%s550 + $0x4] sm:$0xf]
    %v553 = vld [vmem:[%s550 + $0x8] sm:$0xf]
    %v554 = vld [vmem:[%s550 + $0xc] sm:$0xf]
    %v555 = vld [vmem:[%s550 + $0x10] sm:$0xf]
    %v556 = vld [vmem:[%s550 + $0x14] sm:$0xf]
    %v557 = vld [vmem:[%s550 + $0x18] sm:$0xf]
    %v558 = vld [vmem:[%s550 + $0x1c] sm:$0xf]
    %v559 = vld [vmem:[%s550 + $0x20] sm:$0xf]
    %v560 = vld [vmem:[%s550 + $0x24] sm:$0xf]
    %v561 = vld [vmem:[%s550 + $0x28] sm:$0xf]
    %v562 = vld [vmem:[%s550 + $0x2c] sm:$0xf]
    %v563 = vld [vmem:[%s550 + $0x30] sm:$0xf]
    %v564 = vld [vmem:[%s550 + $0x34] sm:$0xf]
    %v565 = vld [vmem:[%s550 + $0x38] sm:$0xf]
    %v566 = vld [vmem:[%s550 + $0x3c] sm:$0xf]
    %v567 = vpack.c.bf16 %v467, %v466
    %v568 = vld [vmem:[%s8 + $0x1] sm:$0x1]
    %v569 = vperm.slane %v568, 0
    %v586 = vunpack.c.l.b16 %v551
    %v587 = vunpack.c.l.b16 %v552
    %v588 = vunpack.c.l.b16 %v553
    %v589 = vunpack.c.l.b16 %v554
    %v590 = vunpack.c.l.b16 %v555
    %v591 = vunpack.c.l.b16 %v556
    %v592 = vunpack.c.l.b16 %v557
    %v593 = vunpack.c.l.b16 %v558
    %v594 = vunpack.c.l.b16 %v559
    %v595 = vunpack.c.l.b16 %v560
    %v596 = vunpack.c.l.b16 %v561
    %v597 = vunpack.c.l.b16 %v562
    %v598 = vunpack.c.l.b16 %v563
    %v599 = vunpack.c.l.b16 %v564
    %v600 = vunpack.c.l.b16 %v565
    %v601 = vunpack.c.l.b16 %v566
    %v602 = vpack.c.b16 %v587, %v586
    %v603 = vpack.c.b16 %v589, %v588
    %v604 = vpack.c.b16 %v591, %v590
    %v605 = vpack.c.b16 %v593, %v592
    %v606 = vpack.c.b16 %v595, %v594
    %v607 = vpack.c.b16 %v597, %v596
    %v608 = vpack.c.b16 %v599, %v598
    %v609 = vpack.c.b16 %v601, %v600
    %618 = vmatpush.bf16.msra.mxu0 %v609
    %619 = vmatpush.bf16.msra.mxu0 %v608
    %620 = vmatpush.bf16.msra.mxu0 %v607
    %621 = vmatpush.bf16.msra.mxu0 %v606
    %622 = vmatpush.bf16.msra.mxu0 %v605
    %623 = vmatpush.bf16.msra.mxu0 %v604
    %624 = vmatpush.bf16.msra.mxu0 %v603
    %625 = vmatpush.bf16.msra.mxu0 %v602
    %626 = vmatmul.bf16.gmra.mxu0 %v567
    %v627 = vpop.f32.mrf.mxu0
    %v628 = vadd.f32 %v569, %v627
    %v629 = vpop.f32.mrf.mxu0
    %v630 = vadd.f32 %v569, %v629
    %631 = vdwg.mxu0
    %v632 = vmax.f32 %v546, 0.0
    %v633 = vmax.f32 %v548, 0.0
    %v634 = vmax.f32 %v628, 0.0
    %v635 = vmax.f32 %v630, 0.0
    %s636 = scalar_lea.vmem [#allocation7], 128
    %v637 = vld [vmem:[%s636] sm:$0xf]
    %v638 = vld [vmem:[%s636 + $0x4] sm:$0xf]
    %v639 = vld [vmem:[%s636 + $0x8] sm:$0xf]
    %v640 = vld [vmem:[%s636 + $0xc] sm:$0xf]
    %v641 = vld [vmem:[%s636 + $0x10] sm:$0xf]
    %v642 = vld [vmem:[%s636 + $0x14] sm:$0xf]
    %v643 = vld [vmem:[%s636 + $0x18] sm:$0xf]
    %v644 = vld [vmem:[%s636 + $0x1c] sm:$0xf]
    %v645 = vld [vmem:[%s636 + $0x20] sm:$0xf]
    %v646 = vld [vmem:[%s636 + $0x24] sm:$0xf]
    %v647 = vld [vmem:[%s636 + $0x28] sm:$0xf]
    %v648 = vld [vmem:[%s636 + $0x2c] sm:$0xf]
    %v649 = vld [vmem:[%s636 + $0x30] sm:$0xf]
    %v650 = vld [vmem:[%s636 + $0x34] sm:$0xf]
    %v651 = vld [vmem:[%s636 + $0x38] sm:$0xf]
    %v652 = vld [vmem:[%s636 + $0x3c] sm:$0xf]
    %v653 = vpack.c.bf16 %v633, %v632
    %v654 = vld [vmem:[%s7 + $0x2] sm:$0x1]
    %v655 = vperm.slane %v654, 0
    %v672 = vunpack.c.l.b16 %v637
    %v673 = vunpack.c.l.b16 %v638
    %v674 = vunpack.c.l.b16 %v639
    %v675 = vunpack.c.l.b16 %v640
    %v676 = vunpack.c.l.b16 %v641
    %v677 = vunpack.c.l.b16 %v642
    %v678 = vunpack.c.l.b16 %v643
    %v679 = vunpack.c.l.b16 %v644
    %v680 = vunpack.c.l.b16 %v645
    %v681 = vunpack.c.l.b16 %v646
    %v682 = vunpack.c.l.b16 %v647
    %v683 = vunpack.c.l.b16 %v648
    %v684 = vunpack.c.l.b16 %v649
    %v685 = vunpack.c.l.b16 %v650
    %v686 = vunpack.c.l.b16 %v651
    %v687 = vunpack.c.l.b16 %v652
    %v688 = vpack.c.b16 %v673, %v672
    %v689 = vpack.c.b16 %v675, %v674
    %v690 = vpack.c.b16 %v677, %v676
    %v691 = vpack.c.b16 %v679, %v678
    %v692 = vpack.c.b16 %v681, %v680
    %v693 = vpack.c.b16 %v683, %v682
    %v694 = vpack.c.b16 %v685, %v684
    %v695 = vpack.c.b16 %v687, %v686
    %704 = vmatpush.bf16.msra.mxu0 %v695
    %705 = vmatpush.bf16.msra.mxu0 %v694
    %706 = vmatpush.bf16.msra.mxu0 %v693
    %707 = vmatpush.bf16.msra.mxu0 %v692
    %708 = vmatpush.bf16.msra.mxu0 %v691
    %709 = vmatpush.bf16.msra.mxu0 %v690
    %710 = vmatpush.bf16.msra.mxu0 %v689
    %711 = vmatpush.bf16.msra.mxu0 %v688
    %712 = vmatmul.bf16.gmra.mxu0 %v653
    %v713 = vpop.f32.mrf.mxu0
    %v714 = vadd.f32 %v655, %v713
    %v715 = vpop.f32.mrf.mxu0
    %v716 = vadd.f32 %v655, %v715
    %717 = vdwg.mxu0
    %s718 = scalar_lea.vmem [#allocation8], 128
    %v719 = vld [vmem:[%s718] sm:$0xf]
    %v720 = vld [vmem:[%s718 + $0x4] sm:$0xf]
    %v721 = vld [vmem:[%s718 + $0x8] sm:$0xf]
    %v722 = vld [vmem:[%s718 + $0xc] sm:$0xf]
    %v723 = vld [vmem:[%s718 + $0x10] sm:$0xf]
    %v724 = vld [vmem:[%s718 + $0x14] sm:$0xf]
    %v725 = vld [vmem:[%s718 + $0x18] sm:$0xf]
    %v726 = vld [vmem:[%s718 + $0x1c] sm:$0xf]
    %v727 = vld [vmem:[%s718 + $0x20] sm:$0xf]
    %v728 = vld [vmem:[%s718 + $0x24] sm:$0xf]
    %v729 = vld [vmem:[%s718 + $0x28] sm:$0xf]
    %v730 = vld [vmem:[%s718 + $0x2c] sm:$0xf]
    %v731 = vld [vmem:[%s718 + $0x30] sm:$0xf]
    %v732 = vld [vmem:[%s718 + $0x34] sm:$0xf]
    %v733 = vld [vmem:[%s718 + $0x38] sm:$0xf]
    %v734 = vld [vmem:[%s718 + $0x3c] sm:$0xf]
    %v735 = vpack.c.bf16 %v635, %v634
    %v736 = vld [vmem:[%s8 + $0x2] sm:$0x1]
    %v737 = vperm.slane %v736, 0
    %v754 = vunpack.c.l.b16 %v719
    %v755 = vunpack.c.l.b16 %v720
    %v756 = vunpack.c.l.b16 %v721
    %v757 = vunpack.c.l.b16 %v722
    %v758 = vunpack.c.l.b16 %v723
    %v759 = vunpack.c.l.b16 %v724
    %v760 = vunpack.c.l.b16 %v725
    %v761 = vunpack.c.l.b16 %v726
    %v762 = vunpack.c.l.b16 %v727
    %v763 = vunpack.c.l.b16 %v728
    %v764 = vunpack.c.l.b16 %v729
    %v765 = vunpack.c.l.b16 %v730
    %v766 = vunpack.c.l.b16 %v731
    %v767 = vunpack.c.l.b16 %v732
    %v768 = vunpack.c.l.b16 %v733
    %v769 = vunpack.c.l.b16 %v734
    %v770 = vpack.c.b16 %v755, %v754
    %v771 = vpack.c.b16 %v757, %v756
    %v772 = vpack.c.b16 %v759, %v758
    %v773 = vpack.c.b16 %v761, %v760
    %v774 = vpack.c.b16 %v763, %v762
    %v775 = vpack.c.b16 %v765, %v764
    %v776 = vpack.c.b16 %v767, %v766
    %v777 = vpack.c.b16 %v769, %v768
    %786 = vmatpush.bf16.msra.mxu0 %v777
    %787 = vmatpush.bf16.msra.mxu0 %v776
    %788 = vmatpush.bf16.msra.mxu0 %v775
    %789 = vmatpush.bf16.msra.mxu0 %v774
    %790 = vmatpush.bf16.msra.mxu0 %v773
    %791 = vmatpush.bf16.msra.mxu0 %v772
    %792 = vmatpush.bf16.msra.mxu0 %v771
    %793 = vmatpush.bf16.msra.mxu0 %v770
    %794 = vmatmul.bf16.gmra.mxu0 %v735
    %v795 = vpop.f32.mrf.mxu0
    %v796 = vadd.f32 %v737, %v795
    %v797 = vpop.f32.mrf.mxu0
    %v798 = vadd.f32 %v737, %v797
    %799 = vdwg.mxu0
    %v800 = vmul.f32 %v714, %v796
    %v801 = vmul.f32 %v716, %v798
    %v802 = vld [vmem:[#allocation10] sm:$0xf]
    %v803 = vld [vmem:[#allocation10 + $0x4] sm:$0xf]
    %v804 = vld [vmem:[#allocation10 + $0x8] sm:$0xf]
    %v805 = vld [vmem:[#allocation10 + $0xc] sm:$0xf]
    %v806 = vld [vmem:[#allocation10 + $0x10] sm:$0xf]
    %v807 = vld [vmem:[#allocation10 + $0x14] sm:$0xf]
    %v808 = vld [vmem:[#allocation10 + $0x18] sm:$0xf]
    %v809 = vld [vmem:[#allocation10 + $0x1c] sm:$0xf]
    %v810 = vld [vmem:[#allocation10 + $0x20] sm:$0xf]
    %v811 = vld [vmem:[#allocation10 + $0x24] sm:$0xf]
    %v812 = vld [vmem:[#allocation10 + $0x28] sm:$0xf]
    %v813 = vld [vmem:[#allocation10 + $0x2c] sm:$0xf]
    %v814 = vld [vmem:[#allocation10 + $0x30] sm:$0xf]
    %v815 = vld [vmem:[#allocation10 + $0x34] sm:$0xf]
    %v816 = vld [vmem:[#allocation10 + $0x38] sm:$0xf]
    %v817 = vld [vmem:[#allocation10 + $0x3c] sm:$0xf]
    %v818 = vpack.c.bf16 %v801, %v800
    %v819 = vld [vmem:[%s9] sm:$0x1]
    %v821 = vperm.slane %v819, 0
    %v839 = vunpack.c.l.b16 %v802
    %v840 = vunpack.c.l.b16 %v803
    %v841 = vunpack.c.l.b16 %v804
    %v842 = vunpack.c.l.b16 %v805
    %v843 = vunpack.c.l.b16 %v806
    %v844 = vunpack.c.l.b16 %v807
    %v845 = vunpack.c.l.b16 %v808
    %v846 = vunpack.c.l.b16 %v809
    %v847 = vunpack.c.l.b16 %v810
    %v848 = vunpack.c.l.b16 %v811
    %v849 = vunpack.c.l.b16 %v812
    %v850 = vunpack.c.l.b16 %v813
    %v851 = vunpack.c.l.b16 %v814
    %v852 = vunpack.c.l.b16 %v815
    %v853 = vunpack.c.l.b16 %v816
    %v854 = vunpack.c.l.b16 %v817
    %v855 = vpack.c.b16 %v840, %v839
    %v856 = vpack.c.b16 %v842, %v841
    %v857 = vpack.c.b16 %v844, %v843
    %v858 = vpack.c.b16 %v846, %v845
    %v859 = vpack.c.b16 %v848, %v847
    %v860 = vpack.c.b16 %v850, %v849
    %v861 = vpack.c.b16 %v852, %v851
    %v862 = vpack.c.b16 %v854, %v853
    %871 = vmatpush.bf16.msra.mxu0 %v862
    %872 = vmatpush.bf16.msra.mxu0 %v861
    %873 = vmatpush.bf16.msra.mxu0 %v860
    %874 = vmatpush.bf16.msra.mxu0 %v859
    %875 = vmatpush.bf16.msra.mxu0 %v858
    %876 = vmatpush.bf16.msra.mxu0 %v857
    %877 = vmatpush.bf16.msra.mxu0 %v856
    %878 = vmatpush.bf16.msra.mxu0 %v855
    %879 = vmatmul.bf16.gmra.mxu0 %v818
    %v880 = vpop.f32.mrf.mxu0
    %v881 = vadd.f32 %v821, %v880
    %v882 = vpop.f32.mrf.mxu0
    %v883 = vadd.f32 %v821, %v882
    %884 = vdwg.mxu0
    %885 = vst [vmem:[#allocation11] sm:$0xff] %v881
    %886 = vst [vmem:[#allocation11 + $0x8] sm:$0xff] %v883
    // Predicated region
    $region62: #{tpu_custom_call.1} parent=1 // pred_check
      _
    $region63: #{tpu_custom_call.1} parent=1 // pred_check_branch
      %888 = sbr.rel (0) target = $region65
    $region64: #{tpu_custom_call.1} parent=1 // pred_region
      %890 = vsyncadd [#allocation4], 0
      %s891 = sshll.u32 [#allocation11], 4
      %s892 = int_to_ptr.vmem [resolvable:$true] %s891
      %s893 = sshll.u32 %s10, 4
      %s894 = int_to_ptr.hbm [resolvable:$true] %s893
      %899 = dma.vmem_to_hbm [thread:$0]  %s892, 256, %s894, [#allocation4], 128, 128, 8
    $region65: #{tpu_custom_call.1} parent=1 // pred_fallthru
      _
    // Predicated region
    $region66: #{tpu_custom_call.1} parent=1 // pred_check
      _
    $region67: #{tpu_custom_call.1} parent=1 // pred_check_branch
      %901 = sbr.rel (0) target = $region69
    $region68: #{tpu_custom_call.1} parent=1 // pred_region
      %903 = dma.done [#allocation4], 256
    $region69: #{tpu_custom_call.1} parent=1 // pred_fallthru
      _
    %904 = vsyncpa [#allocation3], 1
    %905 = vsyncpa [#allocation6], 1
    %906 = vsyncpa [#allocation9], 1
    %907 = vsyncpa [#allocation4], 1

</llo_original>
